<compile_context>
chip_gen: v6e
topology: v6e:2x2x1
jax: 0.10.0
libtpu: 0.0.40
codegen_flags: <defaults>
</compile_context>

<pallas_src>
import functools

import jax
import jax.numpy as jnp
from jax.experimental import pallas as pl
from jax.experimental.pallas import tpu as pltpu


def _round_up(n, m):
    return ((n + m - 1) // m) * m


def _mlp_kernel(n_layers, x_ref, *refs):
    """refs = (w0, b0, w1, b1, ..., w_{L-1}, b_{L-1}, out_ref).

    x_ref:  (TILE_B, D0)   compute dtype (f32 or bf16)
    w_i:    (Din, Dout)    compute dtype (pre-cast in the wrapper)
    b_i:    (1, Dout)      f32 (added to the f32 accumulator)
    out:    (TILE_B, D_L)  f32
    """
    out_ref = refs[-1]
    wb = refs[:-1]

    h = x_ref[...]
    for i in range(n_layers):
        w = wb[2 * i][...]
        b = wb[2 * i + 1][...]
        acc = jnp.dot(h, w, preferred_element_type=jnp.float32) + b
        if i < n_layers - 1:
            # tanh in f32 on the EUP, then back to the MXU compute dtype.
            h = jnp.tanh(acc).astype(w.dtype)
        else:
            h = acc                                  # final layer: no activation
    out_ref[...] = h.astype(out_ref.dtype)


def _choose_batch_tiling(B, tile_b):
    """Pick (tb, b_pad) with tb a multiple of 8, minimal padding waste
    (< 8 rows per grid step), and >= 2 grid steps when B >= 16 so the
    parallel batch axis can be split across v7x's two TensorCores."""
    b8 = _round_up(max(B, 1), 8)
    n_steps = pl.cdiv(b8, max(_round_up(tile_b, 8), 8))
    if n_steps < 2 and b8 >= 16:
        n_steps = 2
    tb = _round_up(pl.cdiv(b8, n_steps), 8)
    b_pad = tb * n_steps
    return tb, b_pad


def dnn_forward(x, params, *, compute_dtype=jnp.float32, tile_b=2048):
    """x: (B, layers[0]) f32. params: list of (w, b) with w (in,out), b (1,out)."""
    B, d_in = x.shape
    n_layers = len(params)
    dims = [d_in] + [w.shape[1] for w, _ in params]
    out_dim = dims[-1]

    tb, b_pad = _choose_batch_tiling(B, tile_b)
    grid = (b_pad // tb,)

    # Activations at their true feature width; only the batch dim is padded
    # (to a multiple of tb), and only when needed.
    xc = x.astype(compute_dtype)
    if b_pad != B:
        xc = jnp.zeros((b_pad, d_in), compute_dtype).at[:B].set(xc)

    flat = []
    param_bytes = 0
    for w, b in params:
        wc = w.astype(compute_dtype)
        bc = b.reshape(1, -1).astype(jnp.float32)
        flat.extend([wc, bc])
        param_bytes += wc.size * wc.dtype.itemsize + bc.size * bc.dtype.itemsize

    x_spec = pl.BlockSpec((tb, d_in), lambda i: (i, 0))
    param_specs = []
    for i in range(n_layers):
        # Full-dim blocks, constant index map -> VMEM-resident across the grid.
        param_specs.append(pl.BlockSpec((dims[i], dims[i + 1]), lambda g: (0, 0)))
        param_specs.append(pl.BlockSpec((1, dims[i + 1]), lambda g: (0, 0)))
    out_spec = pl.BlockSpec((tb, out_dim), lambda i: (i, 0))

    # True (unpadded) work estimate for XLA's scheduler.
    flops = 2 * b_pad * sum(dims[i] * dims[i + 1] for i in range(n_layers))
    transcendentals = b_pad * sum(dims[1:-1])
    bytes_accessed = int(
        xc.size * xc.dtype.itemsize          # activation in
        + b_pad * out_dim * 4                # f32 output
        + param_bytes                        # weights + biases
    )

    out = pl.pallas_call(
        functools.partial(_mlp_kernel, n_layers),
        out_shape=jax.ShapeDtypeStruct((b_pad, out_dim), jnp.float32),
        grid_spec=pltpu.PrefetchScalarGridSpec(
            num_scalar_prefetch=0,
            grid=grid,
            in_specs=[x_spec] + param_specs,
            out_specs=out_spec,
        ),
        compiler_params=pltpu.CompilerParams(
            dimension_semantics=("parallel",),
        ),
        cost_estimate=pl.CostEstimate(
            flops=flops,
            transcendentals=transcendentals,
            bytes_accessed=bytes_accessed,
        ),
    )(xc, *flat)

    # Only the batch padding needs stripping (output feature dim is exact).
    return out[:B] if b_pad != B else out


def init_params(layers, key):
    """Deterministic init mimicking nn.Linear default (uniform +-1/sqrt(fan_in))."""
    params = []
    for i in range(len(layers) - 1):
        fan_in, fan_out = layers[i], layers[i + 1]
        key, kw, kb = jax.random.split(key, 3)
        bound = 1.0 / jnp.sqrt(jnp.asarray(fan_in, jnp.float32))
        w = jax.random.uniform(kw, (fan_in, fan_out), jnp.float32, -bound, bound)
        b = jax.random.uniform(kb, (1, fan_out), jnp.float32, -bound, bound)
        params.append((w, b))
    return params


def dnn_reference(x, params):
    h = x
    n = len(params)
    for i, (w, b) in enumerate(params):
        h = h @ w + b
        if i < n - 1:
            h = jnp.tanh(h)
    return h


if __name__ == "__main__":
    # layers spec like a typical PINN DNN: input dim 2, three hidden of 32, output 1.
    layers = [2, 32, 32, 32, 1]
    batch = 8

    key = jax.random.PRNGKey(0)
    key, kx = jax.random.split(key)
    x = jax.random.normal(kx, (batch, layers[0]), jnp.float32)
    params = init_params(layers, key)

    ref = dnn_reference(x, params)

    # Pure-f32 compute path: matches the reference tightly.
    out_f32 = jax.block_until_ready(dnn_forward(x, params, compute_dtype=jnp.float32))
    assert out_f32.shape == (batch, layers[-1])
    assert jnp.allclose(out_f32, ref, atol=1e-5, rtol=1e-5)

    # bf16-input / f32-accumulate path (MXU-friendly on v6e/v7x).
    out_bf16 = jax.block_until_ready(dnn_forward(x, params, compute_dtype=jnp.bfloat16))
    assert out_bf16.shape == (batch, layers[-1])
    assert jnp.allclose(out_bf16, ref, atol=5e-2, rtol=5e-2)

    # Larger, misaligned batch: exercises adaptive tiling, batch padding and
    # the multi-step (>=2) parallel grid used for v7x megacore.
    key, kx2 = jax.random.split(key)
    x_big = jax.random.normal(kx2, (520, layers[0]), jnp.float32)
    ref_big = dnn_reference(x_big, params)
    out_big = jax.block_until_ready(
        dnn_forward(x_big, params, compute_dtype=jnp.float32, tile_b=2048))
    assert out_big.shape == (520, layers[-1])
    assert jnp.allclose(out_big, ref_big, atol=1e-5, rtol=1e-5)

    print("KERNEL_OK")
</pallas_src>

<mosaic_0001>
module attributes {stable_mosaic.version = 11 : i64} {
  func.func @_mlp_kernel(%arg0: i32, %arg1: memref<8x2xf32, #tpu.memory_space<vmem>>, %arg2: memref<2x32xf32, #tpu.memory_space<vmem>>, %arg3: memref<1x32xf32, #tpu.memory_space<vmem>>, %arg4: memref<32x32xf32, #tpu.memory_space<vmem>>, %arg5: memref<1x32xf32, #tpu.memory_space<vmem>>, %arg6: memref<32x32xf32, #tpu.memory_space<vmem>>, %arg7: memref<1x32xf32, #tpu.memory_space<vmem>>, %arg8: memref<32x1xf32, #tpu.memory_space<vmem>>, %arg9: memref<1x1xf32, #tpu.memory_space<vmem>>, %arg10: memref<8x1xf32, #tpu.memory_space<vmem>>) attributes {dimension_semantics = [#tpu.dimension_semantics<parallel>], iteration_bounds = array<i64: 1>, scalar_prefetch = 0 : i64, scratch_operands = 0 : i64, tpu.core_type = #tpu.core_type<tc>, window_params = [{transform_indices = @transform_0, window_bounds = array<i64: 8, 2>}, {pipeline_mode = #tpu.pipeline_mode<synchronous>, transform_indices = @transform_1, window_bounds = array<i64: 2, 32>}, {pipeline_mode = #tpu.pipeline_mode<synchronous>, transform_indices = @transform_2, window_bounds = array<i64: 1, 32>}, {pipeline_mode = #tpu.pipeline_mode<synchronous>, transform_indices = @transform_3, window_bounds = array<i64: 32, 32>}, {pipeline_mode = #tpu.pipeline_mode<synchronous>, transform_indices = @transform_4, window_bounds = array<i64: 1, 32>}, {pipeline_mode = #tpu.pipeline_mode<synchronous>, transform_indices = @transform_5, window_bounds = array<i64: 32, 32>}, {pipeline_mode = #tpu.pipeline_mode<synchronous>, transform_indices = @transform_6, window_bounds = array<i64: 1, 32>}, {pipeline_mode = #tpu.pipeline_mode<synchronous>, transform_indices = @transform_7, window_bounds = array<i64: 32, 1>}, {pipeline_mode = #tpu.pipeline_mode<synchronous>, transform_indices = @transform_8, window_bounds = array<i64: 1, 1>}, {transform_indices = @transform_9, window_bounds = array<i64: 8, 1>}]} {
    %c0 = arith.constant 0 : index
    %c0_0 = arith.constant 0 : index
    %0 = vector.load %arg1[%c0, %c0_0] : memref<8x2xf32, #tpu.memory_space<vmem>>, vector<8x2xf32>
    %c0_1 = arith.constant 0 : index
    %c0_2 = arith.constant 0 : index
    %1 = vector.load %arg2[%c0_1, %c0_2] : memref<2x32xf32, #tpu.memory_space<vmem>>, vector<2x32xf32>
    %c0_3 = arith.constant 0 : index
    %c0_4 = arith.constant 0 : index
    %2 = vector.load %arg3[%c0_3, %c0_4] : memref<1x32xf32, #tpu.memory_space<vmem>>, vector<1x32xf32>
    %cst = arith.constant dense<0.000000e+00> : vector<8x32xf32>
    %3 = tpu.matmul %0, %1, %cst {dimension_numbers = #tpu.dot_dimension_numbers<[1], [0], [0], [1], [0, 0, 1, 1], [], []>} : vector<8x2xf32>, vector<2x32xf32>, vector<8x32xf32> -> vector<8x32xf32>
    %4 = vector.broadcast %2 : vector<1x32xf32> to vector<8x32xf32>
    %5 = arith.addf %3, %4 : vector<8x32xf32>
    %6 = math.tanh %5 : vector<8x32xf32>
    %c0_5 = arith.constant 0 : index
    %c0_6 = arith.constant 0 : index
    %7 = vector.load %arg4[%c0_5, %c0_6] : memref<32x32xf32, #tpu.memory_space<vmem>>, vector<32x32xf32>
    %c0_7 = arith.constant 0 : index
    %c0_8 = arith.constant 0 : index
    %8 = vector.load %arg5[%c0_7, %c0_8] : memref<1x32xf32, #tpu.memory_space<vmem>>, vector<1x32xf32>
    %cst_9 = arith.constant dense<0.000000e+00> : vector<8x32xf32>
    %9 = tpu.matmul %6, %7, %cst_9 {dimension_numbers = #tpu.dot_dimension_numbers<[1], [0], [0], [1], [0, 0, 1, 1], [], []>} : vector<8x32xf32>, vector<32x32xf32>, vector<8x32xf32> -> vector<8x32xf32>
    %10 = vector.broadcast %8 : vector<1x32xf32> to vector<8x32xf32>
    %11 = arith.addf %9, %10 : vector<8x32xf32>
    %12 = math.tanh %11 : vector<8x32xf32>
    %c0_10 = arith.constant 0 : index
    %c0_11 = arith.constant 0 : index
    %13 = vector.load %arg6[%c0_10, %c0_11] : memref<32x32xf32, #tpu.memory_space<vmem>>, vector<32x32xf32>
    %c0_12 = arith.constant 0 : index
    %c0_13 = arith.constant 0 : index
    %14 = vector.load %arg7[%c0_12, %c0_13] : memref<1x32xf32, #tpu.memory_space<vmem>>, vector<1x32xf32>
    %cst_14 = arith.constant dense<0.000000e+00> : vector<8x32xf32>
    %15 = tpu.matmul %12, %13, %cst_14 {dimension_numbers = #tpu.dot_dimension_numbers<[1], [0], [0], [1], [0, 0, 1, 1], [], []>} : vector<8x32xf32>, vector<32x32xf32>, vector<8x32xf32> -> vector<8x32xf32>
    %16 = vector.broadcast %14 : vector<1x32xf32> to vector<8x32xf32>
    %17 = arith.addf %15, %16 : vector<8x32xf32>
    %18 = math.tanh %17 : vector<8x32xf32>
    %c0_15 = arith.constant 0 : index
    %c0_16 = arith.constant 0 : index
    %19 = vector.load %arg8[%c0_15, %c0_16] : memref<32x1xf32, #tpu.memory_space<vmem>>, vector<32x1xf32>
    %c0_17 = arith.constant 0 : index
    %c0_18 = arith.constant 0 : index
    %20 = vector.load %arg9[%c0_17, %c0_18] : memref<1x1xf32, #tpu.memory_space<vmem>>, vector<1x1xf32>
    %cst_19 = arith.constant dense<0.000000e+00> : vector<8x1xf32>
    %21 = tpu.matmul %18, %19, %cst_19 {dimension_numbers = #tpu.dot_dimension_numbers<[1], [0], [0], [1], [0, 0, 1, 1], [], []>} : vector<8x32xf32>, vector<32x1xf32>, vector<8x1xf32> -> vector<8x1xf32>
    %22 = vector.broadcast %20 : vector<1x1xf32> to vector<8x1xf32>
    %23 = arith.addf %21, %22 : vector<8x1xf32>
    %c0_20 = arith.constant 0 : index
    %c0_21 = arith.constant 0 : index
    %24 = vector.load %arg10[%c0_20, %c0_21] : memref<8x1xf32, #tpu.memory_space<vmem>>, vector<8x1xf32>
    tpu.vector_store %arg10[%c0_20, %c0_21], %23 {strides = array<i32>} : memref<8x1xf32, #tpu.memory_space<vmem>>, vector<8x1xf32>,
    return
  }
  func.func @transform_0(%arg0: i32) -> (i32, i32) {
    %c0_i32 = arith.constant 0 : i32
    %c0_i32_0 = arith.constant 0 : i32
    return %arg0, %c0_i32 : i32, i32
  }
  func.func @transform_1(%arg0: i32) -> (i32, i32) {
    %c0_i32 = arith.constant 0 : i32
    %c0_i32_0 = arith.constant 0 : i32
    %c0_i32_1 = arith.constant 0 : i32
    return %c0_i32, %c0_i32_0 : i32, i32
  }
  func.func @transform_2(%arg0: i32) -> (i32, i32) {
    %c0_i32 = arith.constant 0 : i32
    %c0_i32_0 = arith.constant 0 : i32
    %c0_i32_1 = arith.constant 0 : i32
    return %c0_i32, %c0_i32_0 : i32, i32
  }
  func.func @transform_3(%arg0: i32) -> (i32, i32) {
    %c0_i32 = arith.constant 0 : i32
    %c0_i32_0 = arith.constant 0 : i32
    %c0_i32_1 = arith.constant 0 : i32
    return %c0_i32, %c0_i32_0 : i32, i32
  }
  func.func @transform_4(%arg0: i32) -> (i32, i32) {
    %c0_i32 = arith.constant 0 : i32
    %c0_i32_0 = arith.constant 0 : i32
    %c0_i32_1 = arith.constant 0 : i32
    return %c0_i32, %c0_i32_0 : i32, i32
  }
  func.func @transform_5(%arg0: i32) -> (i32, i32) {
    %c0_i32 = arith.constant 0 : i32
    %c0_i32_0 = arith.constant 0 : i32
    %c0_i32_1 = arith.constant 0 : i32
    return %c0_i32, %c0_i32_0 : i32, i32
  }
  func.func @transform_6(%arg0: i32) -> (i32, i32) {
    %c0_i32 = arith.constant 0 : i32
    %c0_i32_0 = arith.constant 0 : i32
    %c0_i32_1 = arith.constant 0 : i32
    return %c0_i32, %c0_i32_0 : i32, i32
  }
  func.func @transform_7(%arg0: i32) -> (i32, i32) {
    %c0_i32 = arith.constant 0 : i32
    %c0_i32_0 = arith.constant 0 : i32
    %c0_i32_1 = arith.constant 0 : i32
    return %c0_i32, %c0_i32_0 : i32, i32
  }
  func.func @transform_8(%arg0: i32) -> (i32, i32) {
    %c0_i32 = arith.constant 0 : i32
    %c0_i32_0 = arith.constant 0 : i32
    %c0_i32_1 = arith.constant 0 : i32
    return %c0_i32, %c0_i32_0 : i32, i32
  }
  func.func @transform_9(%arg0: i32) -> (i32, i32) {
    %c0_i32 = arith.constant 0 : i32
    %c0_i32_0 = arith.constant 0 : i32
    return %arg0, %c0_i32 : i32, i32
  }
}

</mosaic_0001>

<llo_original>
// kernel: tpu_custom_call.1
$region0: #{tpu_custom_call.1}
  #allocation0 [shape = 'u32[]', space=smem, size = 0x4, offset = 0x4, fixed_abs, tag = 'smem constant byte address 0x4 - core index']
  #allocation1 [shape = 'u32[144,128]{1,0:T(1,128)}', space=vmem, size = 0x12000, scoped, tag = 'internal scratch']
  #allocation2 [shape = 'f32[1,1]{1,0:T(1,128)S(1)}', space=vmem, size = 0x200, scoped, tag = 'scoped memory for tpu_custom_call.1']
  %s0 = inlined_call_operand.vmem [shape: f32[8,2], index: 0, kind: input, shape index: {}]
  %s1 = inlined_call_operand.vmem [shape: f32[2,32], index: 1, kind: input, shape index: {}]
  %s2 = inlined_call_operand.vmem [shape: f32[1,32], index: 2, kind: input, shape index: {}]
  %s3 = inlined_call_operand.vmem [shape: f32[32,32], index: 3, kind: input, shape index: {}]
  %s4 = inlined_call_operand.vmem [shape: f32[1,32], index: 4, kind: input, shape index: {}]
  %s5 = inlined_call_operand.hbm [shape: f32[32,32], index: 5, kind: input, shape index: {}]
  %s6 = inlined_call_operand.vmem [shape: f32[1,32], index: 6, kind: input, shape index: {}]
  %s7 = inlined_call_operand.vmem [shape: f32[32,1], index: 7, kind: input, shape index: {}]
  %s8 = inlined_call_operand.<no memory space> [shape: f32[1,1], index: 8, kind: input, shape index: {}]
  %s9 = inlined_call_operand.vmem [shape: f32[8,1], index: 9, kind: output, shape index: {}]
  %s10 = sld [smem:[#allocation0]]
  $region50: #{tpu_custom_call.1} parent=0
    _
  %s12 = ssub.s32 1, %s10
  %s13 = scalar_select 0, %s12, %s10
  %v14 = vstv %s8
  %15 = vst [vmem:[#allocation2] sm:$0x1] %v14
  $region1: #{tpu_custom_call.1} parent=0
    #allocation3 [shape = 'u8[16384]{0}', space=vmem, size = 0x4000, scoped, tag = 'input window, operand 5, single buffered']
    #allocation4 [shape = 's32[1]{0}', space=sflag, size = 0x4, scoped, tag = 'scoped memory for tpu_custom_call.1']
    %16 = vsyncpa [#allocation4], 0
    // Predicated region
    $region2: #{tpu_custom_call.1} parent=1 // pred_check
      _
    $region3: #{tpu_custom_call.1} parent=1 // pred_check_branch
      %18 = sbr.rel (0) target = $region5
    $region4: #{tpu_custom_call.1} parent=1 // pred_region
      _
    $region5: #{tpu_custom_call.1} parent=1 // pred_fallthru
      _
    // Predicated region
    $region6: #{tpu_custom_call.1} parent=1 // pred_check
      _
    $region7: #{tpu_custom_call.1} parent=1 // pred_check_branch
      %20 = sbr.rel (0) target = $region9
    $region8: #{tpu_custom_call.1} parent=1 // pred_region
      _
    $region9: #{tpu_custom_call.1} parent=1 // pred_fallthru
      _
    // Predicated region
    $region10: #{tpu_custom_call.1} parent=1 // pred_check
      _
    $region11: #{tpu_custom_call.1} parent=1 // pred_check_branch
      %22 = sbr.rel (0) target = $region13
    $region12: #{tpu_custom_call.1} parent=1 // pred_region
      _
    $region13: #{tpu_custom_call.1} parent=1 // pred_fallthru
      _
    // Predicated region
    $region14: #{tpu_custom_call.1} parent=1 // pred_check
      _
    $region15: #{tpu_custom_call.1} parent=1 // pred_check_branch
      %24 = sbr.rel (0) target = $region17
    $region16: #{tpu_custom_call.1} parent=1 // pred_region
      _
    $region17: #{tpu_custom_call.1} parent=1 // pred_fallthru
      _
    // Predicated region
    $region18: #{tpu_custom_call.1} parent=1 // pred_check
      _
    $region19: #{tpu_custom_call.1} parent=1 // pred_check_branch
      %26 = sbr.rel (0) target = $region21
    $region20: #{tpu_custom_call.1} parent=1 // pred_region
      _
    $region21: #{tpu_custom_call.1} parent=1 // pred_fallthru
      _
    // Predicated region
    $region22: #{tpu_custom_call.1} parent=1 // pred_check
      _
    $region23: #{tpu_custom_call.1} parent=1 // pred_check_branch
      %28 = sbr.rel (0) target = $region25
    $region24: #{tpu_custom_call.1} parent=1 // pred_region
      %s30 = ssub.s32 512, 512
      %31 = vsyncadd [#allocation4], %s30
      %s32 = sshll.u32 [#allocation3], 4
      %s33 = int_to_ptr.vmem [resolvable:$true] %s32
      %38 = dma.hbm_to_vmem [thread:$0]  %s5, 512, %s33, [#allocation4], 128, 128, 8
    $region25: #{tpu_custom_call.1} parent=1 // pred_fallthru
      _
    // Predicated region
    $region26: #{tpu_custom_call.1} parent=1 // pred_check
      _
    $region27: #{tpu_custom_call.1} parent=1 // pred_check_branch
      %40 = sbr.rel (0) target = $region29
    $region28: #{tpu_custom_call.1} parent=1 // pred_region
      _
    $region29: #{tpu_custom_call.1} parent=1 // pred_fallthru
      _
    // Predicated region
    $region30: #{tpu_custom_call.1} parent=1 // pred_check
      _
    $region31: #{tpu_custom_call.1} parent=1 // pred_check_branch
      %42 = sbr.rel (0) target = $region33
    $region32: #{tpu_custom_call.1} parent=1 // pred_region
      _
    $region33: #{tpu_custom_call.1} parent=1 // pred_fallthru
      _
    // Predicated region
    $region34: #{tpu_custom_call.1} parent=1 // pred_check
      _
    $region35: #{tpu_custom_call.1} parent=1 // pred_check_branch
      %44 = sbr.rel (0) target = $region37
    $region36: #{tpu_custom_call.1} parent=1 // pred_region
      _
    $region37: #{tpu_custom_call.1} parent=1 // pred_fallthru
      _
    // Predicated region
    $region38: #{tpu_custom_call.1} parent=1 // pred_check
      _
    $region39: #{tpu_custom_call.1} parent=1 // pred_check_branch
      %46 = sbr.rel (0) target = $region41
    $region40: #{tpu_custom_call.1} parent=1 // pred_region
      %47 = dma.done [#allocation4], 512
    $region41: #{tpu_custom_call.1} parent=1 // pred_fallthru
      _
    %v48 = vld [vmem:[%s0] sm:$0xff]
    %v49 = vld [vmem:[%s1] sm:$0x3]
    %v50 = vld [vmem:[%s2] sm:$0x1]
    %v52 = vlaneseq
    %v53 = vshrl.u32 %v52, 7
    %v54 = vsub.s32 0, %v53
    %v55 = vrot.slane %v50, %v54
    %vm57 = vcmask 15360
    %v59 = vsel %vm57, %v48, 0
    %vm61 = vcmask 1041408
    %v63 = vsel %vm61, %v49, 0
    %65 = vmatprep.subr.mxu0 0.0
    %66 = vmatpush1.msra.mxu0 0.0
    %67 = vmatprep.subr.mxu0 0.0
    %68 = vmatpush1.msra.mxu0 0.0
    %69 = vmatprep.subr.mxu0 0.0
    %70 = vmatpush1.msra.mxu0 0.0
    %71 = vmatprep.subr.mxu0 0.0
    %72 = vmatpush1.msra.mxu0 0.0
    %73 = vmatprep.subr.mxu0 0.0
    %74 = vmatpush1.msra.mxu0 0.0
    %75 = vmatprep.subr.mxu0 0.0
    %76 = vmatpush1.msra.mxu0 0.0
    %77 = vmatprep.subr.mxu0 0.0
    %78 = vmatpush1.msra.mxu0 0.0
    %79 = vmatprep.subr.mxu0 0.0
    %80 = vmatpush1.msra.mxu0 0.0
    %81 = vmatprep.subr.mxu0 0.0
    %82 = vmatpush1.msra.mxu0 0.0
    %83 = vmatprep.subr.mxu0 0.0
    %84 = vmatpush1.msra.mxu0 0.0
    %85 = vmatprep.subr.mxu0 0.0
    %86 = vmatpush1.msra.mxu0 0.0
    %87 = vmatprep.subr.mxu0 0.0
    %88 = vmatpush1.msra.mxu0 0.0
    %89 = vmatprep.subr.mxu0 0.0
    %90 = vmatpush1.msra.mxu0 0.0
    %91 = vmatprep.subr.mxu0 0.0
    %92 = vmatpush1.msra.mxu0 0.0
    %93 = vmatprep.subr.mxu0 0.0
    %94 = vmatpush1.msra.mxu0 0.0
    %95 = vmatprep.subr.mxu0 0.0
    %96 = vmatpush1.msra.mxu0 %v63
    %97 = vmatprep.subr.mxu0 0.0
    %98 = vmatpush2.msra.mxu0 0.0
    %99 = vmatprep.subr.mxu0 0.0
    %100 = vmatpush2.msra.mxu0 0.0
    %101 = vmatprep.subr.mxu0 0.0
    %102 = vmatpush2.msra.mxu0 0.0
    %103 = vmatprep.subr.mxu0 0.0
    %104 = vmatpush2.msra.mxu0 0.0
    %105 = vmatprep.subr.mxu0 0.0
    %106 = vmatpush2.msra.mxu0 0.0
    %107 = vmatprep.subr.mxu0 0.0
    %108 = vmatpush2.msra.mxu0 0.0
    %109 = vmatprep.subr.mxu0 0.0
    %110 = vmatpush2.msra.mxu0 0.0
    %111 = vmatprep.subr.mxu0 0.0
    %112 = vmatpush2.msra.mxu0 0.0
    %113 = vmatprep.subr.mxu0 0.0
    %114 = vmatpush2.msra.mxu0 0.0
    %115 = vmatprep.subr.mxu0 0.0
    %116 = vmatpush2.msra.mxu0 0.0
    %117 = vmatprep.subr.mxu0 0.0
    %118 = vmatpush2.msra.mxu0 0.0
    %119 = vmatprep.subr.mxu0 0.0
    %120 = vmatpush2.msra.mxu0 0.0
    %121 = vmatprep.subr.mxu0 0.0
    %122 = vmatpush2.msra.mxu0 0.0
    %123 = vmatprep.subr.mxu0 0.0
    %124 = vmatpush2.msra.mxu0 0.0
    %125 = vmatprep.subr.mxu0 0.0
    %126 = vmatpush2.msra.mxu0 0.0
    %127 = vmatprep.subr.mxu0 0.0
    %128 = vmatpush2.msra.mxu0 0.0
    %129 = vmatprep.mubr.f32.mxu0 0.0
    %130 = vmatmul.mubr.f32.gmra.mxu0 %v59
    %v131 = vpop.f32.mrf.mxu0
    %v132 = vadd.f32 %v55, %v131
    %v133 = vpop.f32.mrf.mxu0
    %134 = vdwg.mxu0
    %v135 = vtanh.pop %v132
    %v136 = vld [vmem:[%s3] sm:$0xff]
    %v137 = vld [vmem:[%s3 + $0x8] sm:$0xff]
    %v138 = vld [vmem:[%s3 + $0x10] sm:$0xff]
    %v139 = vld [vmem:[%s3 + $0x18] sm:$0xff]
    %v140 = vld [vmem:[%s4] sm:$0x1]
    %v142 = vlaneseq
    %v143 = vshrl.u32 %v142, 7
    %v144 = vsub.s32 0, %v143
    %v145 = vrot.slane %v140, %v144
    %vm147 = vcmask 261120
    %v149 = vsel %vm147, %v135, 0
    %151 = vmatprep.subr.mxu0 0.0
    %152 = vmatpush1.msra.mxu0 0.0
    %153 = vmatprep.subr.mxu0 0.0
    %154 = vmatpush1.msra.mxu0 0.0
    %155 = vmatprep.subr.mxu0 0.0
    %156 = vmatpush1.msra.mxu0 0.0
    %157 = vmatprep.subr.mxu0 0.0
    %158 = vmatpush1.msra.mxu0 0.0
    %159 = vmatprep.subr.mxu0 0.0
    %160 = vmatpush1.msra.mxu0 0.0
    %161 = vmatprep.subr.mxu0 0.0
    %162 = vmatpush1.msra.mxu0 0.0
    %163 = vmatprep.subr.mxu0 0.0
    %164 = vmatpush1.msra.mxu0 0.0
    %165 = vmatprep.subr.mxu0 0.0
    %166 = vmatpush1.msra.mxu0 0.0
    %167 = vmatprep.subr.mxu0 0.0
    %168 = vmatpush1.msra.mxu0 0.0
    %169 = vmatprep.subr.mxu0 0.0
    %170 = vmatpush1.msra.mxu0 0.0
    %171 = vmatprep.subr.mxu0 0.0
    %172 = vmatpush1.msra.mxu0 0.0
    %173 = vmatprep.subr.mxu0 0.0
    %174 = vmatpush1.msra.mxu0 0.0
    %175 = vmatprep.subr.mxu0 0.0
    %176 = vmatpush1.msra.mxu0 %v139
    %177 = vmatprep.subr.mxu0 0.0
    %178 = vmatpush1.msra.mxu0 %v138
    %179 = vmatprep.subr.mxu0 0.0
    %180 = vmatpush1.msra.mxu0 %v137
    %181 = vmatprep.subr.mxu0 0.0
    %182 = vmatpush1.msra.mxu0 %v136
    %183 = vmatprep.subr.mxu0 0.0
    %184 = vmatpush2.msra.mxu0 0.0
    %185 = vmatprep.subr.mxu0 0.0
    %186 = vmatpush2.msra.mxu0 0.0
    %187 = vmatprep.subr.mxu0 0.0
    %188 = vmatpush2.msra.mxu0 0.0
    %189 = vmatprep.subr.mxu0 0.0
    %190 = vmatpush2.msra.mxu0 0.0
    %191 = vmatprep.subr.mxu0 0.0
    %192 = vmatpush2.msra.mxu0 0.0
    %193 = vmatprep.subr.mxu0 0.0
    %194 = vmatpush2.msra.mxu0 0.0
    %195 = vmatprep.subr.mxu0 0.0
    %196 = vmatpush2.msra.mxu0 0.0
    %197 = vmatprep.subr.mxu0 0.0
    %198 = vmatpush2.msra.mxu0 0.0
    %199 = vmatprep.subr.mxu0 0.0
    %200 = vmatpush2.msra.mxu0 0.0
    %201 = vmatprep.subr.mxu0 0.0
    %202 = vmatpush2.msra.mxu0 0.0
    %203 = vmatprep.subr.mxu0 0.0
    %204 = vmatpush2.msra.mxu0 0.0
    %205 = vmatprep.subr.mxu0 0.0
    %206 = vmatpush2.msra.mxu0 0.0
    %207 = vmatprep.subr.mxu0 0.0
    %208 = vmatpush2.msra.mxu0 0.0
    %209 = vmatprep.subr.mxu0 0.0
    %210 = vmatpush2.msra.mxu0 0.0
    %211 = vmatprep.subr.mxu0 0.0
    %212 = vmatpush2.msra.mxu0 0.0
    %213 = vmatprep.subr.mxu0 0.0
    %214 = vmatpush2.msra.mxu0 0.0
    %215 = vmatprep.mubr.f32.mxu0 0.0
    %216 = vmatmul.mubr.f32.gmra.mxu0 %v149
    %v217 = vpop.f32.mrf.mxu0
    %v218 = vadd.f32 %v145, %v217
    %v219 = vpop.f32.mrf.mxu0
    %220 = vdwg.mxu0
    %v221 = vtanh.pop %v218
    %v222 = vld [vmem:[#allocation3] sm:$0xff]
    %v223 = vld [vmem:[#allocation3 + $0x8] sm:$0xff]
    %v224 = vld [vmem:[#allocation3 + $0x10] sm:$0xff]
    %v225 = vld [vmem:[#allocation3 + $0x18] sm:$0xff]
    %v226 = vld [vmem:[%s6] sm:$0x1]
    %v228 = vlaneseq
    %v229 = vshrl.u32 %v228, 7
    %v230 = vsub.s32 0, %v229
    %v231 = vrot.slane %v226, %v230
    %v234 = vsel %vm147, %v221, 0
    %236 = vmatprep.subr.mxu0 0.0
    %237 = vmatpush1.msra.mxu0 0.0
    %238 = vmatprep.subr.mxu0 0.0
    %239 = vmatpush1.msra.mxu0 0.0
    %240 = vmatprep.subr.mxu0 0.0
    %241 = vmatpush1.msra.mxu0 0.0
    %242 = vmatprep.subr.mxu0 0.0
    %243 = vmatpush1.msra.mxu0 0.0
    %244 = vmatprep.subr.mxu0 0.0
    %245 = vmatpush1.msra.mxu0 0.0
    %246 = vmatprep.subr.mxu0 0.0
    %247 = vmatpush1.msra.mxu0 0.0
    %248 = vmatprep.subr.mxu0 0.0
    %249 = vmatpush1.msra.mxu0 0.0
    %250 = vmatprep.subr.mxu0 0.0
    %251 = vmatpush1.msra.mxu0 0.0
    %252 = vmatprep.subr.mxu0 0.0
    %253 = vmatpush1.msra.mxu0 0.0
    %254 = vmatprep.subr.mxu0 0.0
    %255 = vmatpush1.msra.mxu0 0.0
    %256 = vmatprep.subr.mxu0 0.0
    %257 = vmatpush1.msra.mxu0 0.0
    %258 = vmatprep.subr.mxu0 0.0
    %259 = vmatpush1.msra.mxu0 0.0
    %260 = vmatprep.subr.mxu0 0.0
    %261 = vmatpush1.msra.mxu0 %v225
    %262 = vmatprep.subr.mxu0 0.0
    %263 = vmatpush1.msra.mxu0 %v224
    %264 = vmatprep.subr.mxu0 0.0
    %265 = vmatpush1.msra.mxu0 %v223
    %266 = vmatprep.subr.mxu0 0.0
    %267 = vmatpush1.msra.mxu0 %v222
    %268 = vmatprep.subr.mxu0 0.0
    %269 = vmatpush2.msra.mxu0 0.0
    %270 = vmatprep.subr.mxu0 0.0
    %271 = vmatpush2.msra.mxu0 0.0
    %272 = vmatprep.subr.mxu0 0.0
    %273 = vmatpush2.msra.mxu0 0.0
    %274 = vmatprep.subr.mxu0 0.0
    %275 = vmatpush2.msra.mxu0 0.0
    %276 = vmatprep.subr.mxu0 0.0
    %277 = vmatpush2.msra.mxu0 0.0
    %278 = vmatprep.subr.mxu0 0.0
    %279 = vmatpush2.msra.mxu0 0.0
    %280 = vmatprep.subr.mxu0 0.0
    %281 = vmatpush2.msra.mxu0 0.0
    %282 = vmatprep.subr.mxu0 0.0
    %283 = vmatpush2.msra.mxu0 0.0
    %284 = vmatprep.subr.mxu0 0.0
    %285 = vmatpush2.msra.mxu0 0.0
    %286 = vmatprep.subr.mxu0 0.0
    %287 = vmatpush2.msra.mxu0 0.0
    %288 = vmatprep.subr.mxu0 0.0
    %289 = vmatpush2.msra.mxu0 0.0
    %290 = vmatprep.subr.mxu0 0.0
    %291 = vmatpush2.msra.mxu0 0.0
    %292 = vmatprep.subr.mxu0 0.0
    %293 = vmatpush2.msra.mxu0 0.0
    %294 = vmatprep.subr.mxu0 0.0
    %295 = vmatpush2.msra.mxu0 0.0
    %296 = vmatprep.subr.mxu0 0.0
    %297 = vmatpush2.msra.mxu0 0.0
    %298 = vmatprep.subr.mxu0 0.0
    %299 = vmatpush2.msra.mxu0 0.0
    %300 = vmatprep.mubr.f32.mxu0 0.0
    %301 = vmatmul.mubr.f32.gmra.mxu0 %v234
    %v302 = vpop.f32.mrf.mxu0
    %v303 = vadd.f32 %v231, %v302
    %v304 = vpop.f32.mrf.mxu0
    %305 = vdwg.mxu0
    %v306 = vtanh.pop %v303
    %v307 = vld [vmem:[%s7] sm:$0xff]
    %v308 = vld [vmem:[%s7 + $0x8] sm:$0xff]
    %v309 = vld [vmem:[%s7 + $0x10] sm:$0xff]
    %v310 = vld [vmem:[%s7 + $0x18] sm:$0xff]
    %v311 = vld [vmem:[#allocation2] sm:$0x1]
    %v313 = vlaneseq
    %v314 = vshrl.u32 %v313, 7
    %v315 = vsub.s32 0, %v314
    %v316 = vrot.slane %v311, %v315
    %v319 = vsel %vm147, %v306, 0
    %321 = vmatprep.subr.mxu0 0.0
    %322 = vmatpush1.msra.mxu0 0.0
    %323 = vmatprep.subr.mxu0 0.0
    %324 = vmatpush1.msra.mxu0 0.0
    %325 = vmatprep.subr.mxu0 0.0
    %326 = vmatpush1.msra.mxu0 0.0
    %327 = vmatprep.subr.mxu0 0.0
    %328 = vmatpush1.msra.mxu0 0.0
    %329 = vmatprep.subr.mxu0 0.0
    %330 = vmatpush1.msra.mxu0 0.0
    %331 = vmatprep.subr.mxu0 0.0
    %332 = vmatpush1.msra.mxu0 0.0
    %333 = vmatprep.subr.mxu0 0.0
    %334 = vmatpush1.msra.mxu0 0.0
    %335 = vmatprep.subr.mxu0 0.0
    %336 = vmatpush1.msra.mxu0 0.0
    %337 = vmatprep.subr.mxu0 0.0
    %338 = vmatpush1.msra.mxu0 0.0
    %339 = vmatprep.subr.mxu0 0.0
    %340 = vmatpush1.msra.mxu0 0.0
    %341 = vmatprep.subr.mxu0 0.0
    %342 = vmatpush1.msra.mxu0 0.0
    %343 = vmatprep.subr.mxu0 0.0
    %344 = vmatpush1.msra.mxu0 0.0
    %345 = vmatprep.subr.mxu0 0.0
    %346 = vmatpush1.msra.mxu0 %v310
    %347 = vmatprep.subr.mxu0 0.0
    %348 = vmatpush1.msra.mxu0 %v309
    %349 = vmatprep.subr.mxu0 0.0
    %350 = vmatpush1.msra.mxu0 %v308
    %351 = vmatprep.subr.mxu0 0.0
    %352 = vmatpush1.msra.mxu0 %v307
    %353 = vmatprep.subr.mxu0 0.0
    %354 = vmatpush2.msra.mxu0 0.0
    %355 = vmatprep.subr.mxu0 0.0
    %356 = vmatpush2.msra.mxu0 0.0
    %357 = vmatprep.subr.mxu0 0.0
    %358 = vmatpush2.msra.mxu0 0.0
    %359 = vmatprep.subr.mxu0 0.0
    %360 = vmatpush2.msra.mxu0 0.0
    %361 = vmatprep.subr.mxu0 0.0
    %362 = vmatpush2.msra.mxu0 0.0
    %363 = vmatprep.subr.mxu0 0.0
    %364 = vmatpush2.msra.mxu0 0.0
    %365 = vmatprep.subr.mxu0 0.0
    %366 = vmatpush2.msra.mxu0 0.0
    %367 = vmatprep.subr.mxu0 0.0
    %368 = vmatpush2.msra.mxu0 0.0
    %369 = vmatprep.subr.mxu0 0.0
    %370 = vmatpush2.msra.mxu0 0.0
    %371 = vmatprep.subr.mxu0 0.0
    %372 = vmatpush2.msra.mxu0 0.0
    %373 = vmatprep.subr.mxu0 0.0
    %374 = vmatpush2.msra.mxu0 0.0
    %375 = vmatprep.subr.mxu0 0.0
    %376 = vmatpush2.msra.mxu0 0.0
    %377 = vmatprep.subr.mxu0 0.0
    %378 = vmatpush2.msra.mxu0 0.0
    %379 = vmatprep.subr.mxu0 0.0
    %380 = vmatpush2.msra.mxu0 0.0
    %381 = vmatprep.subr.mxu0 0.0
    %382 = vmatpush2.msra.mxu0 0.0
    %383 = vmatprep.subr.mxu0 0.0
    %384 = vmatpush2.msra.mxu0 0.0
    %385 = vmatprep.mubr.f32.mxu0 0.0
    %386 = vmatmul.mubr.f32.gmra.mxu0 %v319
    %v387 = vpop.f32.mrf.mxu0
    %v388 = vadd.f32 %v316, %v387
    %v389 = vpop.f32.mrf.mxu0
    %390 = vdwg.mxu0
    %vm391 = vcmask 7168
    %392 = vst.msk [vmem:[%s9] sm:$0xff] %vm391, %v388
    // Predicated region
    $region42: #{tpu_custom_call.1} parent=1 // pred_check
      _
    $region43: #{tpu_custom_call.1} parent=1 // pred_check_branch
      %394 = sbr.rel (0) target = $region45
    $region44: #{tpu_custom_call.1} parent=1 // pred_region
      _
    $region45: #{tpu_custom_call.1} parent=1 // pred_fallthru
      _
    // Predicated region
    $region46: #{tpu_custom_call.1} parent=1 // pred_check
      _
    $region47: #{tpu_custom_call.1} parent=1 // pred_check_branch
      %396 = sbr.rel (0) target = $region49
    $region48: #{tpu_custom_call.1} parent=1 // pred_region
      _
    $region49: #{tpu_custom_call.1} parent=1 // pred_fallthru
      _
    %397 = vsyncpa [#allocation4], 1

</llo_original>
